<compile_context>
chip_gen: v5e
topology: v5e:2x2
jax: 0.10.0
libtpu: 0.0.40
codegen_flags: <defaults>
</compile_context>

<pallas_src>
import functools

import jax
import jax.numpy as jnp
from jax import lax
from jax.experimental import pallas as pl
from jax.experimental.pallas import tpu as pltpu


def _round_up(x, m):
    return ((x + m - 1) // m) * m


def _vmem_capacity_bytes():
    try:
        return int(pltpu.get_tpu_info().vmem_capacity_bytes)
    except Exception:
        return 64 << 20          # conservative: v7x has 64 MiB per TensorCore


# -----------------------------------------------------------------------------
# One OperatorNet layer on a lane-dense row-vector state (pure jnp; reused by
# both Pallas kernels and by the matched-precision reference).
# -----------------------------------------------------------------------------
def _layer_math(h, wa, wb, bias_row, xT, dimp, use_relu):
    """h: (1,dimp) f32 | wa/wb: (dimp,N) wdtype | bias_row: (1,N) f32 | xT: (dimp,dimp)."""
    h_c = h.astype(xT.dtype)                                     # cast once, reuse
    xh = jnp.dot(h_c, xT, preferred_element_type=jnp.float32)    # (X h)^T = h_row @ X^T
    out = (jnp.dot(h_c, wa, preferred_element_type=jnp.float32)
           + jnp.dot(xh.astype(wa.dtype), wb, preferred_element_type=jnp.float32)
           + bias_row)                                           # (1, N) f32
    if use_relu:
        # lane-aligned split (dimp is a multiple of 128) -> no relayout on chain
        return out[:, :dimp] + jnp.maximum(out[:, dimp:], 0.0)
    return out


# -----------------------------------------------------------------------------
# Kernels
# -----------------------------------------------------------------------------
def _make_resident_kernel(dimp, num_layers, use_relu, scalar_output, unroll):
    """Whole (small) packed stack: one DMA, single-buffered, in-kernel layer loop."""

    def kernel(*refs):
        it = iter(refs)
        xT_ref = next(it)                       # (dimp, dimp)     VMEM
        bias_ref = next(it)                     # (L, 1, N) f32    VMEM
        w_hbm = next(it)                        # (L, 2, dimp, N)  HBM (pl.ANY)
        wdp_ref = next(it) if scalar_output else None
        out_ref = next(it)                      # (1, out_w) f32
        wbuf = next(it)                         # (L, 2, dimp, N)  VMEM scratch (1x)
        sem = next(it)                          # DMA sem (1,)

        cp = pltpu.make_async_copy(w_hbm, wbuf, sem.at[0])
        cp.start()
        cp.wait()

        xT = xT_ref[...]

        def body(l, h):
            return _layer_math(h, wbuf[l, 0], wbuf[l, 1], bias_ref[l], xT,
                               dimp, use_relu)

        h = lax.fori_loop(0, num_layers, body,
                          jnp.zeros((1, dimp), jnp.float32), unroll=unroll)

        if scalar_output:
            out_ref[...] = jnp.sum(h * wdp_ref[...], axis=-1, keepdims=True)
        else:
            out_ref[...] = h

    return kernel


def _make_streaming_kernel(dimp, num_layers, nbuf, use_relu, scalar_output):
    """Per-layer weight blocks streamed HBM->VMEM with a manual multi-buffer
    inside a single grid step: layer l+1's DMA overlaps layer l's GEMV."""

    def kernel(*refs):
        it = iter(refs)
        xT_ref = next(it)                       # (dimp, dimp)     VMEM
        bias_ref = next(it)                     # (L, 1, N) f32    VMEM
        w_hbm = next(it)                        # (L, 2, dimp, N)  HBM (pl.ANY)
        wdp_ref = next(it) if scalar_output else None
        out_ref = next(it)                      # (1, out_w) f32
        h_scr = next(it)                        # (1, dimp) f32 scratch
        wbuf = next(it)                         # (nbuf, 2, dimp, N)
        sem = next(it)                          # DMA sems (nbuf,)

        def start_fetch(layer, slot):
            pltpu.make_async_copy(w_hbm.at[layer], wbuf.at[slot],
                                  sem.at[slot]).start()

        # Prime nbuf-1 fetches (prefetch depth = nbuf - 1).
        for s in range(min(nbuf - 1, num_layers)):
            start_fetch(s, s)

        h_scr[...] = jnp.zeros_like(h_scr)
        xT = xT_ref[...]

        @pl.loop(0, num_layers)
        def _(l):
            slot = l % nbuf
            pltpu.make_async_copy(w_hbm.at[0], wbuf.at[slot], sem.at[slot]).wait()

            nxt = l + (nbuf - 1)

            @pl.when(nxt < num_layers)
            def _():
                start_fetch(nxt, nxt % nbuf)

            h_scr[...] = _layer_math(h_scr[...], wbuf[slot, 0], wbuf[slot, 1],
                                     bias_ref[l], xT, dimp, use_relu)

        h = h_scr[...]
        if scalar_output:
            out_ref[...] = jnp.sum(h * wdp_ref[...], axis=-1, keepdims=True)
        else:
            out_ref[...] = h

    return kernel


# -----------------------------------------------------------------------------
# One-time parameter packing (call at init, NOT per forward call)
# -----------------------------------------------------------------------------
def pack_params(params, use_relu, weight_dtype=jnp.bfloat16):
    """Transpose + zero-pad + stack the per-layer weights once.

        W[l, 0] = [A0^T | A1^T]   (dimp, N)   N = 2*dimp if use_relu else dimp
        W[l, 1] = [B0^T | B1^T]   (dimp, N)

    dimp = round_up(dim, 128) so every matmul is lane/sublane aligned; padded
    lanes stay exactly zero through the recurrence.  Pass
    weight_dtype=jnp.float32 for an exact-precision (2x weight-traffic) mode.
    """
    A0 = params["A0"]
    L, dim, _ = A0.shape
    dimp = _round_up(dim, 128)
    pad2 = ((0, 0), (0, dimp - dim), (0, dimp - dim))
    padb = ((0, 0), (0, 0), (0, dimp - dim))

    def t(m):                                    # (L, r, c) -> (L, c, r)
        return jnp.transpose(m, (0, 2, 1))

    A0T = jnp.pad(t(params["A0"]), pad2)
    B0T = jnp.pad(t(params["B0"]), pad2)
    b0T = jnp.pad(t(params["b0"]), padb)          # (L, 1, dimp)
    if use_relu:
        A1T = jnp.pad(t(params["A1"]), pad2)
        B1T = jnp.pad(t(params["B1"]), pad2)
        b1T = jnp.pad(t(params["b1"]), padb)
        WA = jnp.concatenate([A0T, A1T], axis=2)   # (L, dimp, 2*dimp)
        WB = jnp.concatenate([B0T, B1T], axis=2)
        bias = jnp.concatenate([b0T, b1T], axis=2)  # (L, 1, 2*dimp)
    else:
        WA, WB, bias = A0T, B0T, b0T

    W = jnp.stack([WA, WB], axis=1)                # (L, 2, dimp, N)
    packed = {"W": W.astype(weight_dtype), "bias": bias.astype(jnp.float32)}
    if "w_dp" in params:
        packed["w_dp"] = jnp.pad(params["w_dp"],
                                 ((0, 0), (0, dimp - dim))).astype(jnp.float32)
    return packed


# -----------------------------------------------------------------------------
# Pallas wrapper
# -----------------------------------------------------------------------------
@functools.partial(jax.jit,
                   static_argnames=("use_relu", "scalar_output", "force_streaming"))
def operator_net_pallas(X, packed, use_relu, scalar_output, force_streaming=False):
    """X: (dim, dim) f32. Returns (dim, 1), or (1,) if scalar_output (PyTorch-like)."""
    W = packed["W"]                               # (L, 2, dimp, N)
    bias = packed["bias"]                         # (L, 1, N) f32
    L, _, dimp, N = W.shape
    dim = X.shape[0]
    out_w = 1 if scalar_output else dimp

    # Per-call input transpose + zero-pad + cast (weights were packed at init).
    xT = jnp.zeros((dimp, dimp), W.dtype).at[:dim, :dim].set(X.T.astype(W.dtype))

    inputs = [xT, bias, W]
    if scalar_output:
        inputs.append(packed["w_dp"])

    # ---- generation-aware VMEM budgeting ------------------------------------
    cap = _vmem_capacity_bytes()                  # 64 MiB v7x, 128 MiB v5e/v6e
    budget = min(int(0.4 * cap), 28 << 20)        # residency / buffering budget
    limit_cap = cap - max(12 << 20, cap // 8)     # headroom for compiler scratch

    itemsize_w = W.dtype.itemsize
    stack_bytes = int(W.size) * itemsize_w
    per_layer_bytes = 2 * dimp * N * itemsize_w
    fixed_bytes = 2 * (int(xT.size) * xT.dtype.itemsize + int(bias.size) * 4
                       + (dimp * 4 if scalar_output else 0) + out_w * 4)

    resident = (not force_streaming) and (stack_bytes + fixed_bytes <= budget)

    in_specs = [
        pl.BlockSpec((dimp, dimp), lambda i: (0, 0)),      # xT  (resident, VMEM)
        pl.BlockSpec((L, 1, N), lambda i: (0, 0, 0)),      # bias (resident, VMEM)
        pl.BlockSpec(memory_space=pl.ANY),                 # W stays in HBM
    ]
    if scalar_output:
        in_specs.append(pl.BlockSpec((1, dimp), lambda i: (0, 0)))

    if resident:
        kernel = _make_resident_kernel(dimp, L, use_relu, scalar_output,
                                       unroll=min(L, 8))
        scratch = [pltpu.VMEM((L, 2, dimp, N), W.dtype),
                   pltpu.SemaphoreType.DMA((1,))]
        vmem_est = stack_bytes + fixed_bytes + (1 << 20)
    else:
        # 3-deep buffering only where VMEM is plentiful (v5e/v6e); 2 otherwise.
        nbuf = 3 if (L >= 3 and 3 * per_layer_bytes + fixed_bytes <= budget) else 2
        # TODO(synk): if even 2*per_layer_bytes + fixed_bytes > limit_cap (very
        # large dim), add N-column tiling of each layer block (512-1024 lanes).
        kernel = _make_streaming_kernel(dimp, L, nbuf, use_relu, scalar_output)
        scratch = [pltpu.VMEM((1, dimp), jnp.float32),
                   pltpu.VMEM((nbuf, 2, dimp, N), W.dtype),
                   pltpu.SemaphoreType.DMA((nbuf,))]
        vmem_est = nbuf * per_layer_bytes + fixed_bytes + (1 << 20)

    cp_kwargs = dict(dimension_semantics=("arbitrary",))
    if vmem_est > (16 << 20):            # below every generation's scoped default
        cp_kwargs["vmem_limit_bytes"] = int(min(vmem_est + (8 << 20), limit_cap))

    out = pl.pallas_call(
        kernel,
        out_shape=jax.ShapeDtypeStruct((1, out_w), jnp.float32),
        grid_spec=pltpu.PrefetchScalarGridSpec(
            num_scalar_prefetch=0,
            grid=(1,),
            in_specs=in_specs,
            out_specs=pl.BlockSpec((1, out_w), lambda i: (0, 0)),
            scratch_shapes=scratch,
        ),
        compiler_params=pltpu.CompilerParams(**cp_kwargs),
    )(*inputs)

    # TODO(synk): if the workload has a batch of X's / h's sharing the weights,
    # batch them into the LHS rows (B, dimp) and add a leading "parallel" grid
    # axis (2 TensorCores on v7x) - by far the largest remaining win.

    if scalar_output:
        return out.reshape((-1,))            # (1,)     like PyTorch
    return out[:, :dim].T                    # (dim, 1) like PyTorch


# -----------------------------------------------------------------------------
# References
# -----------------------------------------------------------------------------
def operator_net_ref(X, params, use_relu, scalar_output):
    """Pure-JAX float32 reference matching the PyTorch forward exactly."""
    dim = X.shape[0]
    L = params["A0"].shape[0]
    h = jnp.zeros((dim, 1), jnp.float32)
    for i in range(L):
        h0 = params["b0"][i] + params["A0"][i] @ h + params["B0"][i] @ (X @ h)
        if use_relu:
            h1 = (params["b1"][i] + params["A1"][i] @ h
                  + params["B1"][i] @ (X @ h))
            h = h0 + jnp.maximum(h1, 0.0)
        else:
            h = h0
    if scalar_output:
        return (h.reshape(1, dim) @ params["w_dp"].T).reshape((-1,))
    return h


def operator_net_matched_ref(X, packed, use_relu, scalar_output):
    """Plain-JAX reference mirroring the kernel math (same dtypes / padding)."""
    W = packed["W"]
    bias = packed["bias"]
    L, _, dimp, _ = W.shape
    dim = X.shape[0]
    xT = jnp.zeros((dimp, dimp), W.dtype).at[:dim, :dim].set(X.T.astype(W.dtype))
    h = jnp.zeros((1, dimp), jnp.float32)
    for l in range(L):
        h = _layer_math(h, W[l, 0], W[l, 1], bias[l], xT, dimp, use_relu)
    if scalar_output:
        return jnp.sum(h * packed["w_dp"], axis=-1).reshape((-1,))
    return h[:, :dim].T


# -----------------------------------------------------------------------------
# Deterministic parameter init (mirrors torch init.uniform_(-1/sqrt(d), 1/sqrt(d)))
# -----------------------------------------------------------------------------
def init_params(key, dim, num_layers, use_relu, scalar_output):
    bound = 1.0 / jnp.sqrt(jnp.float32(dim))
    keys = jax.random.split(key, 8)

    def u(k, shape):
        return jax.random.uniform(k, shape, jnp.float32, -bound, bound)

    params = {
        "A0": u(keys[0], (num_layers, dim, dim)),
        "B0": u(keys[1], (num_layers, dim, dim)),
        "b0": u(keys[2], (num_layers, dim, 1)),
    }
    if use_relu:
        params["A1"] = u(keys[3], (num_layers, dim, dim))
        params["B1"] = u(keys[4], (num_layers, dim, dim))
        params["b1"] = u(keys[5], (num_layers, dim, 1))
    if scalar_output:
        params["w_dp"] = u(keys[6], (1, dim))
    return params


# -----------------------------------------------------------------------------
if __name__ == "__main__":
    key = jax.random.PRNGKey(0)
    kx, kp = jax.random.split(key)

    configs = [
        dict(dim=32, num_layers=3, use_relu=True, scalar_output=True,
             force_streaming=False),
        dict(dim=32, num_layers=3, use_relu=False, scalar_output=False,
             force_streaming=False),
        # also exercise the overlapped streaming (manual multi-buffer) path
        dict(dim=32, num_layers=5, use_relu=True, scalar_output=False,
             force_streaming=True),
    ]

    for cfg in configs:
        dim, L = cfg["dim"], cfg["num_layers"]
        use_relu, scalar_output = cfg["use_relu"], cfg["scalar_output"]

        X = jax.random.normal(kx, (dim, dim), jnp.float32)
        params = init_params(kp, dim, L, use_relu, scalar_output)
        packed = pack_params(params, use_relu)          # one-time packing

        out = operator_net_pallas(X, packed, use_relu=use_relu,
                                  scalar_output=scalar_output,
                                  force_streaming=cfg["force_streaming"])
        out = jax.block_until_ready(out)

        ref_match = operator_net_matched_ref(X, packed, use_relu, scalar_output)
        ref_f32 = operator_net_ref(X, params, use_relu, scalar_output)

        assert out.shape == ref_f32.shape, (out.shape, ref_f32.shape)
        # Kernel vs identical-precision (bf16-weight, padded) JAX math: tight.
        assert jnp.allclose(out, ref_match, rtol=5e-3, atol=5e-3), \
            (cfg, out, ref_match)
        # Kernel vs exact float32 PyTorch math: loose (bf16 weight storage).
        assert jnp.allclose(out, ref_f32, rtol=1.5e-1, atol=1.5e-1), \
            (cfg, out, ref_f32)

    print("KERNEL_OK")
</pallas_src>

<mosaic_0001>
module attributes {stable_mosaic.version = 11 : i64} {
  func.func @kernel(%arg0: i32, %arg1: memref<128x128xbf16, #tpu.memory_space<vmem>>, %arg2: memref<3x1x256xf32, #tpu.memory_space<vmem>>, %arg3: memref<3x2x128x256xbf16, #tpu.memory_space<any>>, %arg4: memref<1x128xf32, #tpu.memory_space<vmem>>, %arg5: memref<1x1xf32, #tpu.memory_space<vmem>>, %arg6: memref<3x2x128x256xbf16, #tpu.memory_space<vmem>>, %arg7: memref<1x!tpu.dma_semaphore, #tpu.memory_space<semaphore_mem>>) attributes {dimension_semantics = [#tpu.dimension_semantics<arbitrary>], iteration_bounds = array<i64: 1>, scalar_prefetch = 0 : i64, scratch_operands = 2 : i64, tpu.core_type = #tpu.core_type<tc>, window_params = [{pipeline_mode = #tpu.pipeline_mode<synchronous>, transform_indices = @transform_0, window_bounds = array<i64: 128, 128>}, {pipeline_mode = #tpu.pipeline_mode<synchronous>, transform_indices = @transform_1, window_bounds = array<i64: 3, 1, 256>}, {}, {pipeline_mode = #tpu.pipeline_mode<synchronous>, transform_indices = @transform_3, window_bounds = array<i64: 1, 128>}, {pipeline_mode = #tpu.pipeline_mode<synchronous>, transform_indices = @transform_4, window_bounds = array<i64: 1, 1>}]} {
    %c0_i32 = arith.constant 0 : i32
    %0 = tpu.memref_slice %arg7[%c0_i32] : memref<1x!tpu.dma_semaphore, #tpu.memory_space<semaphore_mem>> -> memref<1x!tpu.dma_semaphore, #tpu.memory_space<semaphore_mem>>
    %1 = tpu.memref_squeeze %0 : memref<1x!tpu.dma_semaphore, #tpu.memory_space<semaphore_mem>> -> memref<!tpu.dma_semaphore, #tpu.memory_space<semaphore_mem>>
    tpu.enqueue_dma source(%arg3 : memref<3x2x128x256xbf16, #tpu.memory_space<any>>) target(%arg6 : memref<3x2x128x256xbf16, #tpu.memory_space<vmem>>) target_semaphore(%1 : memref<!tpu.dma_semaphore, #tpu.memory_space<semaphore_mem>>)
    %c0_i32_0 = arith.constant 0 : i32
    %2 = tpu.memref_slice %arg7[%c0_i32_0] : memref<1x!tpu.dma_semaphore, #tpu.memory_space<semaphore_mem>> -> memref<1x!tpu.dma_semaphore, #tpu.memory_space<semaphore_mem>>
    %3 = tpu.memref_squeeze %2 : memref<1x!tpu.dma_semaphore, #tpu.memory_space<semaphore_mem>> -> memref<!tpu.dma_semaphore, #tpu.memory_space<semaphore_mem>>
    tpu.wait_dma2 semaphore(%3 : memref<!tpu.dma_semaphore, #tpu.memory_space<semaphore_mem>>) src(%arg3 : memref<3x2x128x256xbf16, #tpu.memory_space<any>>) dst(%arg6 : memref<3x2x128x256xbf16, #tpu.memory_space<vmem>>)
    %c0 = arith.constant 0 : index
    %c0_1 = arith.constant 0 : index
    %4 = vector.load %arg1[%c0, %c0_1] : memref<128x128xbf16, #tpu.memory_space<vmem>>, vector<128x128xbf16>
    %cst = arith.constant 0.000000e+00 : f32
    %5 = vector.broadcast %cst : f32 to vector<1x128xf32>
    %c0_i32_2 = arith.constant 0 : i32
    %6 = arith.index_cast %c0_i32_2 : i32 to index
    %c0_3 = arith.constant 0 : index
    %c0_4 = arith.constant 0 : index
    %c0_5 = arith.constant 0 : index
    %7 = vector.load %arg6[%6, %c0_3, %c0_4, %c0_5] : memref<3x2x128x256xbf16, #tpu.memory_space<vmem>>, vector<1x1x128x256xbf16>
    %8 = vector.shape_cast %7 : vector<1x1x128x256xbf16> to vector<128x256xbf16>
    %9 = arith.index_cast %c0_i32_2 : i32 to index
    %c1 = arith.constant 1 : index
    %c0_6 = arith.constant 0 : index
    %c0_7 = arith.constant 0 : index
    %10 = vector.load %arg6[%9, %c1, %c0_6, %c0_7] : memref<3x2x128x256xbf16, #tpu.memory_space<vmem>>, vector<1x1x128x256xbf16>
    %11 = vector.shape_cast %10 : vector<1x1x128x256xbf16> to vector<128x256xbf16>
    %12 = arith.index_cast %c0_i32_2 : i32 to index
    %c0_8 = arith.constant 0 : index
    %c0_9 = arith.constant 0 : index
    %13 = vector.load %arg2[%12, %c0_8, %c0_9] : memref<3x1x256xf32, #tpu.memory_space<vmem>>, vector<1x1x256xf32>
    %14 = vector.shape_cast %13 : vector<1x1x256xf32> to vector<1x256xf32>
    %15 = arith.truncf %5 : vector<1x128xf32> to vector<1x128xbf16>
    %cst_10 = arith.constant dense<0.000000e+00> : vector<1x128xf32>
    %16 = tpu.matmul %15, %4, %cst_10 {dimension_numbers = #tpu.dot_dimension_numbers<[1], [0], [0], [1], [0, 0, 1, 1], [], []>} : vector<1x128xbf16>, vector<128x128xbf16>, vector<1x128xf32> -> vector<1x128xf32>
    %cst_11 = arith.constant dense<0.000000e+00> : vector<1x256xf32>
    %17 = tpu.matmul %15, %8, %cst_11 {dimension_numbers = #tpu.dot_dimension_numbers<[1], [0], [0], [1], [0, 0, 1, 1], [], []>} : vector<1x128xbf16>, vector<128x256xbf16>, vector<1x256xf32> -> vector<1x256xf32>
    %18 = arith.truncf %16 : vector<1x128xf32> to vector<1x128xbf16>
    %cst_12 = arith.constant dense<0.000000e+00> : vector<1x256xf32>
    %19 = tpu.matmul %18, %11, %cst_12 {dimension_numbers = #tpu.dot_dimension_numbers<[1], [0], [0], [1], [0, 0, 1, 1], [], []>} : vector<1x128xbf16>, vector<128x256xbf16>, vector<1x256xf32> -> vector<1x256xf32>
    %20 = arith.addf %17, %19 : vector<1x256xf32>
    %21 = arith.addf %20, %14 : vector<1x256xf32>
    %22 = vector.extract_strided_slice %21 {offsets = [0, 0], sizes = [1, 128], strides = [1, 1]} : vector<1x256xf32> to vector<1x128xf32>
    %23 = vector.extract_strided_slice %21 {offsets = [0, 128], sizes = [1, 128], strides = [1, 1]} : vector<1x256xf32> to vector<1x128xf32>
    %cst_13 = arith.constant 0.000000e+00 : f32
    %24 = vector.broadcast %cst_13 : f32 to vector<1x128xf32>
    %25 = arith.maximumf %23, %24 : vector<1x128xf32>
    %26 = arith.addf %22, %25 : vector<1x128xf32>
    %c1_i32 = arith.constant 1 : i32
    %27 = arith.index_cast %c1_i32 : i32 to index
    %c0_14 = arith.constant 0 : index
    %c0_15 = arith.constant 0 : index
    %c0_16 = arith.constant 0 : index
    %28 = vector.load %arg6[%27, %c0_14, %c0_15, %c0_16] : memref<3x2x128x256xbf16, #tpu.memory_space<vmem>>, vector<1x1x128x256xbf16>
    %29 = vector.shape_cast %28 : vector<1x1x128x256xbf16> to vector<128x256xbf16>
    %30 = arith.index_cast %c1_i32 : i32 to index
    %c1_17 = arith.constant 1 : index
    %c0_18 = arith.constant 0 : index
    %c0_19 = arith.constant 0 : index
    %31 = vector.load %arg6[%30, %c1_17, %c0_18, %c0_19] : memref<3x2x128x256xbf16, #tpu.memory_space<vmem>>, vector<1x1x128x256xbf16>
    %32 = vector.shape_cast %31 : vector<1x1x128x256xbf16> to vector<128x256xbf16>
    %33 = arith.index_cast %c1_i32 : i32 to index
    %c0_20 = arith.constant 0 : index
    %c0_21 = arith.constant 0 : index
    %34 = vector.load %arg2[%33, %c0_20, %c0_21] : memref<3x1x256xf32, #tpu.memory_space<vmem>>, vector<1x1x256xf32>
    %35 = vector.shape_cast %34 : vector<1x1x256xf32> to vector<1x256xf32>
    %36 = arith.truncf %26 : vector<1x128xf32> to vector<1x128xbf16>
    %cst_22 = arith.constant dense<0.000000e+00> : vector<1x128xf32>
    %37 = tpu.matmul %36, %4, %cst_22 {dimension_numbers = #tpu.dot_dimension_numbers<[1], [0], [0], [1], [0, 0, 1, 1], [], []>} : vector<1x128xbf16>, vector<128x128xbf16>, vector<1x128xf32> -> vector<1x128xf32>
    %cst_23 = arith.constant dense<0.000000e+00> : vector<1x256xf32>
    %38 = tpu.matmul %36, %29, %cst_23 {dimension_numbers = #tpu.dot_dimension_numbers<[1], [0], [0], [1], [0, 0, 1, 1], [], []>} : vector<1x128xbf16>, vector<128x256xbf16>, vector<1x256xf32> -> vector<1x256xf32>
    %39 = arith.truncf %37 : vector<1x128xf32> to vector<1x128xbf16>
    %cst_24 = arith.constant dense<0.000000e+00> : vector<1x256xf32>
    %40 = tpu.matmul %39, %32, %cst_24 {dimension_numbers = #tpu.dot_dimension_numbers<[1], [0], [0], [1], [0, 0, 1, 1], [], []>} : vector<1x128xbf16>, vector<128x256xbf16>, vector<1x256xf32> -> vector<1x256xf32>
    %41 = arith.addf %38, %40 : vector<1x256xf32>
    %42 = arith.addf %41, %35 : vector<1x256xf32>
    %43 = vector.extract_strided_slice %42 {offsets = [0, 0], sizes = [1, 128], strides = [1, 1]} : vector<1x256xf32> to vector<1x128xf32>
    %44 = vector.extract_strided_slice %42 {offsets = [0, 128], sizes = [1, 128], strides = [1, 1]} : vector<1x256xf32> to vector<1x128xf32>
    %cst_25 = arith.constant 0.000000e+00 : f32
    %45 = vector.broadcast %cst_25 : f32 to vector<1x128xf32>
    %46 = arith.maximumf %44, %45 : vector<1x128xf32>
    %47 = arith.addf %43, %46 : vector<1x128xf32>
    %c2_i32 = arith.constant 2 : i32
    %48 = arith.index_cast %c2_i32 : i32 to index
    %c0_26 = arith.constant 0 : index
    %c0_27 = arith.constant 0 : index
    %c0_28 = arith.constant 0 : index
    %49 = vector.load %arg6[%48, %c0_26, %c0_27, %c0_28] : memref<3x2x128x256xbf16, #tpu.memory_space<vmem>>, vector<1x1x128x256xbf16>
    %50 = vector.shape_cast %49 : vector<1x1x128x256xbf16> to vector<128x256xbf16>
    %51 = arith.index_cast %c2_i32 : i32 to index
    %c1_29 = arith.constant 1 : index
    %c0_30 = arith.constant 0 : index
    %c0_31 = arith.constant 0 : index
    %52 = vector.load %arg6[%51, %c1_29, %c0_30, %c0_31] : memref<3x2x128x256xbf16, #tpu.memory_space<vmem>>, vector<1x1x128x256xbf16>
    %53 = vector.shape_cast %52 : vector<1x1x128x256xbf16> to vector<128x256xbf16>
    %54 = arith.index_cast %c2_i32 : i32 to index
    %c0_32 = arith.constant 0 : index
    %c0_33 = arith.constant 0 : index
    %55 = vector.load %arg2[%54, %c0_32, %c0_33] : memref<3x1x256xf32, #tpu.memory_space<vmem>>, vector<1x1x256xf32>
    %56 = vector.shape_cast %55 : vector<1x1x256xf32> to vector<1x256xf32>
    %57 = arith.truncf %47 : vector<1x128xf32> to vector<1x128xbf16>
    %cst_34 = arith.constant dense<0.000000e+00> : vector<1x128xf32>
    %58 = tpu.matmul %57, %4, %cst_34 {dimension_numbers = #tpu.dot_dimension_numbers<[1], [0], [0], [1], [0, 0, 1, 1], [], []>} : vector<1x128xbf16>, vector<128x128xbf16>, vector<1x128xf32> -> vector<1x128xf32>
    %cst_35 = arith.constant dense<0.000000e+00> : vector<1x256xf32>
    %59 = tpu.matmul %57, %50, %cst_35 {dimension_numbers = #tpu.dot_dimension_numbers<[1], [0], [0], [1], [0, 0, 1, 1], [], []>} : vector<1x128xbf16>, vector<128x256xbf16>, vector<1x256xf32> -> vector<1x256xf32>
    %60 = arith.truncf %58 : vector<1x128xf32> to vector<1x128xbf16>
    %cst_36 = arith.constant dense<0.000000e+00> : vector<1x256xf32>
    %61 = tpu.matmul %60, %53, %cst_36 {dimension_numbers = #tpu.dot_dimension_numbers<[1], [0], [0], [1], [0, 0, 1, 1], [], []>} : vector<1x128xbf16>, vector<128x256xbf16>, vector<1x256xf32> -> vector<1x256xf32>
    %62 = arith.addf %59, %61 : vector<1x256xf32>
    %63 = arith.addf %62, %56 : vector<1x256xf32>
    %64 = vector.extract_strided_slice %63 {offsets = [0, 0], sizes = [1, 128], strides = [1, 1]} : vector<1x256xf32> to vector<1x128xf32>
    %65 = vector.extract_strided_slice %63 {offsets = [0, 128], sizes = [1, 128], strides = [1, 1]} : vector<1x256xf32> to vector<1x128xf32>
    %cst_37 = arith.constant 0.000000e+00 : f32
    %66 = vector.broadcast %cst_37 : f32 to vector<1x128xf32>
    %67 = arith.maximumf %65, %66 : vector<1x128xf32>
    %68 = arith.addf %64, %67 : vector<1x128xf32>
    %c3_i32 = arith.constant 3 : i32
    %c0_38 = arith.constant 0 : index
    %c0_39 = arith.constant 0 : index
    %69 = vector.load %arg4[%c0_38, %c0_39] : memref<1x128xf32, #tpu.memory_space<vmem>>, vector<1x128xf32>
    %70 = arith.mulf %68, %69 : vector<1x128xf32>
    %cst_40 = arith.constant dense<0.000000e+00> : vector<1xf32>
    %71 = vector.multi_reduction <add>, %70, %cst_40 [1] : vector<1x128xf32> to vector<1xf32>
    %72 = vector.shape_cast %71 : vector<1xf32> to vector<1x1xf32>
    %c0_41 = arith.constant 0 : index
    %c0_42 = arith.constant 0 : index
    %73 = vector.load %arg5[%c0_41, %c0_42] : memref<1x1xf32, #tpu.memory_space<vmem>>, vector<1x1xf32>
    tpu.vector_store %arg5[%c0_41, %c0_42], %72 {strides = array<i32>} : memref<1x1xf32, #tpu.memory_space<vmem>>, vector<1x1xf32>,
    return
  }
  func.func @transform_0(%arg0: i32) -> (i32, i32) {
    %c0_i32 = arith.constant 0 : i32
    %c0_i32_0 = arith.constant 0 : i32
    %c0_i32_1 = arith.constant 0 : i32
    return %c0_i32, %c0_i32_0 : i32, i32
  }
  func.func @transform_1(%arg0: i32) -> (i32, i32, i32) {
    %c0_i32 = arith.constant 0 : i32
    %c0_i32_0 = arith.constant 0 : i32
    %c0_i32_1 = arith.constant 0 : i32
    %c0_i32_2 = arith.constant 0 : i32
    return %c0_i32, %c0_i32_0, %c0_i32_1 : i32, i32, i32
  }
  func.func @transform_3(%arg0: i32) -> (i32, i32) {
    %c0_i32 = arith.constant 0 : i32
    %c0_i32_0 = arith.constant 0 : i32
    %c0_i32_1 = arith.constant 0 : i32
    return %c0_i32, %c0_i32_0 : i32, i32
  }
  func.func @transform_4(%arg0: i32) -> (i32, i32) {
    %c0_i32 = arith.constant 0 : i32
    %c0_i32_0 = arith.constant 0 : i32
    %c0_i32_1 = arith.constant 0 : i32
    return %c0_i32, %c0_i32_0 : i32, i32
  }
}

</mosaic_0001>

<llo_original>
// kernel: operator_net_pallas.1
$region0: #{operator_net_pallas.1}
  #allocation0 [shape = 'u32[]', space=smem, size = 0x4, offset = 0x4, fixed_abs, tag = 'smem constant byte address 0x4 - core index']
  #allocation1 [shape = 'u32[72,128]{1,0:T(1,128)}', space=vmem, size = 0x9000, scoped, tag = 'internal scratch']
  #allocation2 [shape = 'bf16[3,2,128,256]{3,2,1,0:T(8,128)(2,1)}', space=vmem, size = 0x60000, scoped, tag = 'scratch operand']
  #allocation3 [shape = 's32[1]{0}', space=sflag, size = 0x4, scoped, tag = 'scratch operand']
  #allocation6 [shape = 's32[]', space=sflag, size = 0x4, offset = 0, fixed_abs, tag = 'sflag constant byte address 0x0 - dummy sync flag']
  #allocation7 [shape = 's32[]', space=sflag, size = 0x4, offset = 0, fixed_abs, tag = 'sflag constant byte address 0x0 - dummy sync flag']
  #allocation8 [shape = 'u32[]', space=smem, size = 0x4, offset = 0x44, fixed_abs, tag = 'smem constant byte address 0x44 - assertion arg 0']
  #allocation9 [shape = 'u32[]', space=smem, size = 0x4, offset = 0x48, fixed_abs, tag = 'smem constant byte address 0x48 - assertion arg 1']
  %s0 = inlined_call_operand.vmem [shape: bf16[128,128], index: 0, kind: input, shape index: {}]
  %s1 = inlined_call_operand.vmem [shape: f32[3,1,256], index: 1, kind: input, shape index: {}]
  %s2 = inlined_call_operand.hbm [shape: bf16[3,2,128,256], index: 2, kind: input, shape index: {}]
  %s3 = inlined_call_operand.vmem [shape: f32[1,128], index: 3, kind: input, shape index: {}]
  %s4 = inlined_call_operand.hbm [shape: f32[1,1], index: 4, kind: output, shape index: {}]
  %s5 = sld [smem:[#allocation0]]
  $region26: #{operator_net_pallas.1} parent=0
    _
  %s7 = ssub.s32 1, %s5
  %s8 = scalar_select 0, %s7, %s5
  $region1: #{operator_net_pallas.1} parent=0
    #allocation4 [shape = 'u8[512]{0}', space=vmem, size = 0x400, scoped, tag = 'output window, operand 0, single buffered']
    #allocation5 [shape = 's32[1]{0}', space=sflag, size = 0x4, scoped, tag = 'scoped memory for operator_net_pallas.1']
    %9 = vsyncpa [#allocation5], 0
    // Predicated region
    $region2: #{operator_net_pallas.1} parent=1 // pred_check
      _
    $region3: #{operator_net_pallas.1} parent=1 // pred_check_branch
      %11 = sbr.rel (0) target = $region5
    $region4: #{operator_net_pallas.1} parent=1 // pred_region
      _
    $region5: #{operator_net_pallas.1} parent=1 // pred_fallthru
      _
    // Predicated region
    $region6: #{operator_net_pallas.1} parent=1 // pred_check
      _
    $region7: #{operator_net_pallas.1} parent=1 // pred_check_branch
      %13 = sbr.rel (0) target = $region9
    $region8: #{operator_net_pallas.1} parent=1 // pred_region
      _
    $region9: #{operator_net_pallas.1} parent=1 // pred_fallthru
      _
    // Predicated region
    $region10: #{operator_net_pallas.1} parent=1 // pred_check
      _
    $region11: #{operator_net_pallas.1} parent=1 // pred_check_branch
      %15 = sbr.rel (0) target = $region13
    $region12: #{operator_net_pallas.1} parent=1 // pred_region
      _
    $region13: #{operator_net_pallas.1} parent=1 // pred_fallthru
      _
    // Predicated region
    $region14: #{operator_net_pallas.1} parent=1 // pred_check
      _
    $region15: #{operator_net_pallas.1} parent=1 // pred_check_branch
      %18 = sbr.rel target = $region17
    $region16: #{operator_net_pallas.1} parent=1 // pred_region
      %19 = sst [smem:[#allocation8]] [#allocation7]
      %20 = sst [smem:[#allocation9]] [#allocation6]
    $region17: #{operator_net_pallas.1} parent=1 // pred_fallthru
      _
    %22 = shalt.err (0)
    %s24 = sshll.u32 %s2, 4
    %s25 = int_to_ptr.hbm [resolvable:$true] %s24
    %s26 = sshll.u32 [#allocation2], 4
    %s27 = int_to_ptr.vmem [resolvable:$true] %s26
    %29 = dma.hbm_to_vmem [thread:$0]  %s25, 12288, %s27, [#allocation3]
    %s30 = smul.u32 4, 3
    %s31 = smul.u32 %s30, 2
    %s32 = smul.u32 %s31, 16
    %s33 = smul.u32 %s32, 2
    %s34 = sshll.u32 %s33, 4
    %35 = dma.done [#allocation3], %s34
    %v36 = vld [vmem:[%s0] sm:$0xf]
    %v37 = vld [vmem:[%s0 + $0x4] sm:$0xf]
    %v38 = vld [vmem:[%s0 + $0x8] sm:$0xf]
    %v39 = vld [vmem:[%s0 + $0xc] sm:$0xf]
    %v40 = vld [vmem:[%s0 + $0x10] sm:$0xf]
    %v41 = vld [vmem:[%s0 + $0x14] sm:$0xf]
    %v42 = vld [vmem:[%s0 + $0x18] sm:$0xf]
    %v43 = vld [vmem:[%s0 + $0x1c] sm:$0xf]
    %v44 = vld [vmem:[%s0 + $0x20] sm:$0xf]
    %v45 = vld [vmem:[%s0 + $0x24] sm:$0xf]
    %v46 = vld [vmem:[%s0 + $0x28] sm:$0xf]
    %v47 = vld [vmem:[%s0 + $0x2c] sm:$0xf]
    %v48 = vld [vmem:[%s0 + $0x30] sm:$0xf]
    %v49 = vld [vmem:[%s0 + $0x34] sm:$0xf]
    %v50 = vld [vmem:[%s0 + $0x38] sm:$0xf]
    %v51 = vld [vmem:[%s0 + $0x3c] sm:$0xf]
    %v52 = vld [vmem:[#allocation2] sm:$0xff]
    %v53 = vld [vmem:[#allocation2 + $0x8] sm:$0xff]
    %v54 = vld [vmem:[#allocation2 + $0x10] sm:$0xff]
    %v55 = vld [vmem:[#allocation2 + $0x18] sm:$0xff]
    %v56 = vld [vmem:[#allocation2 + $0x20] sm:$0xff]
    %v57 = vld [vmem:[#allocation2 + $0x28] sm:$0xff]
    %v58 = vld [vmem:[#allocation2 + $0x30] sm:$0xff]
    %v59 = vld [vmem:[#allocation2 + $0x38] sm:$0xff]
    %v60 = vld [vmem:[#allocation2 + $0x40] sm:$0xff]
    %v61 = vld [vmem:[#allocation2 + $0x48] sm:$0xff]
    %v62 = vld [vmem:[#allocation2 + $0x50] sm:$0xff]
    %v63 = vld [vmem:[#allocation2 + $0x58] sm:$0xff]
    %v64 = vld [vmem:[#allocation2 + $0x60] sm:$0xff]
    %v65 = vld [vmem:[#allocation2 + $0x68] sm:$0xff]
    %v66 = vld [vmem:[#allocation2 + $0x70] sm:$0xff]
    %v67 = vld [vmem:[#allocation2 + $0x78] sm:$0xff]
    %s68 = scalar_lea.vmem [#allocation2], 128
    %v69 = vld [vmem:[%s68] sm:$0xff]
    %v70 = vld [vmem:[%s68 + $0x8] sm:$0xff]
    %v71 = vld [vmem:[%s68 + $0x10] sm:$0xff]
    %v72 = vld [vmem:[%s68 + $0x18] sm:$0xff]
    %v73 = vld [vmem:[%s68 + $0x20] sm:$0xff]
    %v74 = vld [vmem:[%s68 + $0x28] sm:$0xff]
    %v75 = vld [vmem:[%s68 + $0x30] sm:$0xff]
    %v76 = vld [vmem:[%s68 + $0x38] sm:$0xff]
    %v77 = vld [vmem:[%s68 + $0x40] sm:$0xff]
    %v78 = vld [vmem:[%s68 + $0x48] sm:$0xff]
    %v79 = vld [vmem:[%s68 + $0x50] sm:$0xff]
    %v80 = vld [vmem:[%s68 + $0x58] sm:$0xff]
    %v81 = vld [vmem:[%s68 + $0x60] sm:$0xff]
    %v82 = vld [vmem:[%s68 + $0x68] sm:$0xff]
    %v83 = vld [vmem:[%s68 + $0x70] sm:$0xff]
    %v84 = vld [vmem:[%s68 + $0x78] sm:$0xff]
    %v85 = vld [vmem:[%s1] sm:$0x3]
    %v102 = vunpack.c.l.b16 %v36
    %v103 = vunpack.c.l.b16 %v37
    %v104 = vunpack.c.l.b16 %v38
    %v105 = vunpack.c.l.b16 %v39
    %v106 = vunpack.c.l.b16 %v40
    %v107 = vunpack.c.l.b16 %v41
    %v108 = vunpack.c.l.b16 %v42
    %v109 = vunpack.c.l.b16 %v43
    %v110 = vunpack.c.l.b16 %v44
    %v111 = vunpack.c.l.b16 %v45
    %v112 = vunpack.c.l.b16 %v46
    %v113 = vunpack.c.l.b16 %v47
    %v114 = vunpack.c.l.b16 %v48
    %v115 = vunpack.c.l.b16 %v49
    %v116 = vunpack.c.l.b16 %v50
    %v117 = vunpack.c.l.b16 %v51
    %v118 = vpack.c.b16 %v103, %v102
    %v119 = vpack.c.b16 %v105, %v104
    %v120 = vpack.c.b16 %v107, %v106
    %v121 = vpack.c.b16 %v109, %v108
    %v122 = vpack.c.b16 %v111, %v110
    %v123 = vpack.c.b16 %v113, %v112
    %v124 = vpack.c.b16 %v115, %v114
    %v125 = vpack.c.b16 %v117, %v116
    %134 = vmatpush.bf16.msra.mxu0 %v125
    %135 = vmatpush.bf16.msra.mxu0 %v124
    %136 = vmatpush.bf16.msra.mxu0 %v123
    %137 = vmatpush.bf16.msra.mxu0 %v122
    %138 = vmatpush.bf16.msra.mxu0 %v121
    %139 = vmatpush.bf16.msra.mxu0 %v120
    %140 = vmatpush.bf16.msra.mxu0 %v119
    %141 = vmatpush.bf16.msra.mxu0 %v118
    %142 = vmatmul.bf16.gmra.mxu0 0
    %v143 = vpop.f32.mrf.mxu0
    %v144 = vadd.f32 0.0, %v143
    %v145 = vpop.f32.mrf.mxu0
    %146 = vdwg.mxu0
    %v147 = vpack.c.bf16 %v144, %v144
    %v164 = vunpack.c.l.b16 %v69
    %v165 = vunpack.c.h.b16 %v69
    %v166 = vunpack.c.l.b16 %v70
    %v167 = vunpack.c.h.b16 %v70
    %v168 = vunpack.c.l.b16 %v71
    %v169 = vunpack.c.h.b16 %v71
    %v170 = vunpack.c.l.b16 %v72
    %v171 = vunpack.c.h.b16 %v72
    %v172 = vunpack.c.l.b16 %v73
    %v173 = vunpack.c.h.b16 %v73
    %v174 = vunpack.c.l.b16 %v74
    %v175 = vunpack.c.h.b16 %v74
    %v176 = vunpack.c.l.b16 %v75
    %v177 = vunpack.c.h.b16 %v75
    %v178 = vunpack.c.l.b16 %v76
    %v179 = vunpack.c.h.b16 %v76
    %v180 = vunpack.c.l.b16 %v77
    %v181 = vunpack.c.h.b16 %v77
    %v182 = vunpack.c.l.b16 %v78
    %v183 = vunpack.c.h.b16 %v78
    %v184 = vunpack.c.l.b16 %v79
    %v185 = vunpack.c.h.b16 %v79
    %v186 = vunpack.c.l.b16 %v80
    %v187 = vunpack.c.h.b16 %v80
    %v188 = vunpack.c.l.b16 %v81
    %v189 = vunpack.c.h.b16 %v81
    %v190 = vunpack.c.l.b16 %v82
    %v191 = vunpack.c.h.b16 %v82
    %v192 = vunpack.c.l.b16 %v83
    %v193 = vunpack.c.h.b16 %v83
    %v194 = vunpack.c.l.b16 %v84
    %v195 = vunpack.c.h.b16 %v84
    %v196 = vpack.c.b16 %v166, %v164
    %v197 = vpack.c.b16 %v167, %v165
    %v198 = vpack.c.b16 %v170, %v168
    %v199 = vpack.c.b16 %v171, %v169
    %v200 = vpack.c.b16 %v174, %v172
    %v201 = vpack.c.b16 %v175, %v173
    %v202 = vpack.c.b16 %v178, %v176
    %v203 = vpack.c.b16 %v179, %v177
    %v204 = vpack.c.b16 %v182, %v180
    %v205 = vpack.c.b16 %v183, %v181
    %v206 = vpack.c.b16 %v186, %v184
    %v207 = vpack.c.b16 %v187, %v185
    %v208 = vpack.c.b16 %v190, %v188
    %v209 = vpack.c.b16 %v191, %v189
    %v210 = vpack.c.b16 %v194, %v192
    %v211 = vpack.c.b16 %v195, %v193
    %228 = vmatpush.bf16.msra.mxu0 %v210
    %229 = vmatpush.bf16.msra.mxu0 %v208
    %230 = vmatpush.bf16.msra.mxu0 %v206
    %231 = vmatpush.bf16.msra.mxu0 %v204
    %232 = vmatpush.bf16.msra.mxu0 %v202
    %233 = vmatpush.bf16.msra.mxu0 %v200
    %234 = vmatpush.bf16.msra.mxu0 %v198
    %235 = vmatpush.bf16.msra.mxu0 %v196
    %236 = vmatmul.bf16.gmra.mxu0 %v147
    %v237 = vpop.f32.mrf.mxu0
    %v238 = vadd.f32 0.0, %v237
    %v239 = vpop.f32.mrf.mxu0
    %240 = vdwg.mxu0
    %241 = vmatpush.bf16.msra.mxu0 %v211
    %242 = vmatpush.bf16.msra.mxu0 %v209
    %243 = vmatpush.bf16.msra.mxu0 %v207
    %244 = vmatpush.bf16.msra.mxu0 %v205
    %245 = vmatpush.bf16.msra.mxu0 %v203
    %246 = vmatpush.bf16.msra.mxu0 %v201
    %247 = vmatpush.bf16.msra.mxu0 %v199
    %248 = vmatpush.bf16.msra.mxu0 %v197
    %249 = vmatmul.bf16.gmra.mxu0 %v147
    %v250 = vpop.f32.mrf.mxu0
    %v251 = vadd.f32 0.0, %v250
    %v252 = vpop.f32.mrf.mxu0
    %253 = vdwg.mxu0
    %v270 = vunpack.c.l.b16 %v52
    %v271 = vunpack.c.h.b16 %v52
    %v272 = vunpack.c.l.b16 %v53
    %v273 = vunpack.c.h.b16 %v53
    %v274 = vunpack.c.l.b16 %v54
    %v275 = vunpack.c.h.b16 %v54
    %v276 = vunpack.c.l.b16 %v55
    %v277 = vunpack.c.h.b16 %v55
    %v278 = vunpack.c.l.b16 %v56
    %v279 = vunpack.c.h.b16 %v56
    %v280 = vunpack.c.l.b16 %v57
    %v281 = vunpack.c.h.b16 %v57
    %v282 = vunpack.c.l.b16 %v58
    %v283 = vunpack.c.h.b16 %v58
    %v284 = vunpack.c.l.b16 %v59
    %v285 = vunpack.c.h.b16 %v59
    %v286 = vunpack.c.l.b16 %v60
    %v287 = vunpack.c.h.b16 %v60
    %v288 = vunpack.c.l.b16 %v61
    %v289 = vunpack.c.h.b16 %v61
    %v290 = vunpack.c.l.b16 %v62
    %v291 = vunpack.c.h.b16 %v62
    %v292 = vunpack.c.l.b16 %v63
    %v293 = vunpack.c.h.b16 %v63
    %v294 = vunpack.c.l.b16 %v64
    %v295 = vunpack.c.h.b16 %v64
    %v296 = vunpack.c.l.b16 %v65
    %v297 = vunpack.c.h.b16 %v65
    %v298 = vunpack.c.l.b16 %v66
    %v299 = vunpack.c.h.b16 %v66
    %v300 = vunpack.c.l.b16 %v67
    %v301 = vunpack.c.h.b16 %v67
    %v302 = vpack.c.b16 %v272, %v270
    %v303 = vpack.c.b16 %v273, %v271
    %v304 = vpack.c.b16 %v276, %v274
    %v305 = vpack.c.b16 %v277, %v275
    %v306 = vpack.c.b16 %v280, %v278
    %v307 = vpack.c.b16 %v281, %v279
    %v308 = vpack.c.b16 %v284, %v282
    %v309 = vpack.c.b16 %v285, %v283
    %v310 = vpack.c.b16 %v288, %v286
    %v311 = vpack.c.b16 %v289, %v287
    %v312 = vpack.c.b16 %v292, %v290
    %v313 = vpack.c.b16 %v293, %v291
    %v314 = vpack.c.b16 %v296, %v294
    %v315 = vpack.c.b16 %v297, %v295
    %v316 = vpack.c.b16 %v300, %v298
    %v317 = vpack.c.b16 %v301, %v299
    %334 = vmatpush.bf16.msra.mxu0 %v316
    %335 = vmatpush.bf16.msra.mxu0 %v314
    %336 = vmatpush.bf16.msra.mxu0 %v312
    %337 = vmatpush.bf16.msra.mxu0 %v310
    %338 = vmatpush.bf16.msra.mxu0 %v308
    %339 = vmatpush.bf16.msra.mxu0 %v306
    %340 = vmatpush.bf16.msra.mxu0 %v304
    %341 = vmatpush.bf16.msra.mxu0 %v302
    %342 = vmatmul.bf16.gmra.mxu0 0
    %v343 = vpop.f32.mrf.mxu0
    %v344 = vadd.f32 %v238, %v343
    %v345 = vpop.f32.mrf.mxu0
    %346 = vdwg.mxu0
    %347 = vmatpush.bf16.msra.mxu0 %v317
    %348 = vmatpush.bf16.msra.mxu0 %v315
    %349 = vmatpush.bf16.msra.mxu0 %v313
    %350 = vmatpush.bf16.msra.mxu0 %v311
    %351 = vmatpush.bf16.msra.mxu0 %v309
    %352 = vmatpush.bf16.msra.mxu0 %v307
    %353 = vmatpush.bf16.msra.mxu0 %v305
    %354 = vmatpush.bf16.msra.mxu0 %v303
    %355 = vmatmul.bf16.gmra.mxu0 0
    %v356 = vpop.f32.mrf.mxu0
    %v357 = vadd.f32 %v251, %v356
    %v358 = vpop.f32.mrf.mxu0
    %359 = vdwg.mxu0
    %v361 = vperm.slane %v85, 0
    %v362 = vperm.slane %v85, 1
    %v365 = vadd.f32 %v344, %v361
    %v366 = vadd.f32 %v357, %v362
    %v367 = vmax.f32 %v366, 0.0
    %v368 = vadd.f32 %v365, %v367
    %s369 = scalar_lea.vmem [#allocation2], 256
    %v370 = vld [vmem:[%s369] sm:$0xff]
    %v371 = vld [vmem:[%s369 + $0x8] sm:$0xff]
    %v372 = vld [vmem:[%s369 + $0x10] sm:$0xff]
    %v373 = vld [vmem:[%s369 + $0x18] sm:$0xff]
    %v374 = vld [vmem:[%s369 + $0x20] sm:$0xff]
    %v375 = vld [vmem:[%s369 + $0x28] sm:$0xff]
    %v376 = vld [vmem:[%s369 + $0x30] sm:$0xff]
    %v377 = vld [vmem:[%s369 + $0x38] sm:$0xff]
    %v378 = vld [vmem:[%s369 + $0x40] sm:$0xff]
    %v379 = vld [vmem:[%s369 + $0x48] sm:$0xff]
    %v380 = vld [vmem:[%s369 + $0x50] sm:$0xff]
    %v381 = vld [vmem:[%s369 + $0x58] sm:$0xff]
    %v382 = vld [vmem:[%s369 + $0x60] sm:$0xff]
    %v383 = vld [vmem:[%s369 + $0x68] sm:$0xff]
    %v384 = vld [vmem:[%s369 + $0x70] sm:$0xff]
    %v385 = vld [vmem:[%s369 + $0x78] sm:$0xff]
    %s386 = scalar_lea.vmem [#allocation2], 384
    %v387 = vld [vmem:[%s386] sm:$0xff]
    %v388 = vld [vmem:[%s386 + $0x8] sm:$0xff]
    %v389 = vld [vmem:[%s386 + $0x10] sm:$0xff]
    %v390 = vld [vmem:[%s386 + $0x18] sm:$0xff]
    %v391 = vld [vmem:[%s386 + $0x20] sm:$0xff]
    %v392 = vld [vmem:[%s386 + $0x28] sm:$0xff]
    %v393 = vld [vmem:[%s386 + $0x30] sm:$0xff]
    %v394 = vld [vmem:[%s386 + $0x38] sm:$0xff]
    %v395 = vld [vmem:[%s386 + $0x40] sm:$0xff]
    %v396 = vld [vmem:[%s386 + $0x48] sm:$0xff]
    %v397 = vld [vmem:[%s386 + $0x50] sm:$0xff]
    %v398 = vld [vmem:[%s386 + $0x58] sm:$0xff]
    %v399 = vld [vmem:[%s386 + $0x60] sm:$0xff]
    %v400 = vld [vmem:[%s386 + $0x68] sm:$0xff]
    %v401 = vld [vmem:[%s386 + $0x70] sm:$0xff]
    %v402 = vld [vmem:[%s386 + $0x78] sm:$0xff]
    %s403 = scalar_lea.vmem %s1, 2
    %v404 = vld [vmem:[%s403] sm:$0x3]
    %v405 = vpack.c.bf16 %v368, %v368
    %406 = vmatpush.bf16.msra.mxu0 %v125
    %407 = vmatpush.bf16.msra.mxu0 %v124
    %408 = vmatpush.bf16.msra.mxu0 %v123
    %409 = vmatpush.bf16.msra.mxu0 %v122
    %410 = vmatpush.bf16.msra.mxu0 %v121
    %411 = vmatpush.bf16.msra.mxu0 %v120
    %412 = vmatpush.bf16.msra.mxu0 %v119
    %413 = vmatpush.bf16.msra.mxu0 %v118
    %414 = vmatmul.bf16.gmra.mxu0 %v405
    %v415 = vpop.f32.mrf.mxu0
    %v416 = vadd.f32 0.0, %v415
    %v417 = vpop.f32.mrf.mxu0
    %418 = vdwg.mxu0
    %v419 = vpack.c.bf16 %v416, %v416
    %v436 = vunpack.c.l.b16 %v387
    %v437 = vunpack.c.h.b16 %v387
    %v438 = vunpack.c.l.b16 %v388
    %v439 = vunpack.c.h.b16 %v388
    %v440 = vunpack.c.l.b16 %v389
    %v441 = vunpack.c.h.b16 %v389
    %v442 = vunpack.c.l.b16 %v390
    %v443 = vunpack.c.h.b16 %v390
    %v444 = vunpack.c.l.b16 %v391
    %v445 = vunpack.c.h.b16 %v391
    %v446 = vunpack.c.l.b16 %v392
    %v447 = vunpack.c.h.b16 %v392
    %v448 = vunpack.c.l.b16 %v393
    %v449 = vunpack.c.h.b16 %v393
    %v450 = vunpack.c.l.b16 %v394
    %v451 = vunpack.c.h.b16 %v394
    %v452 = vunpack.c.l.b16 %v395
    %v453 = vunpack.c.h.b16 %v395
    %v454 = vunpack.c.l.b16 %v396
    %v455 = vunpack.c.h.b16 %v396
    %v456 = vunpack.c.l.b16 %v397
    %v457 = vunpack.c.h.b16 %v397
    %v458 = vunpack.c.l.b16 %v398
    %v459 = vunpack.c.h.b16 %v398
    %v460 = vunpack.c.l.b16 %v399
    %v461 = vunpack.c.h.b16 %v399
    %v462 = vunpack.c.l.b16 %v400
    %v463 = vunpack.c.h.b16 %v400
    %v464 = vunpack.c.l.b16 %v401
    %v465 = vunpack.c.h.b16 %v401
    %v466 = vunpack.c.l.b16 %v402
    %v467 = vunpack.c.h.b16 %v402
    %v468 = vpack.c.b16 %v438, %v436
    %v469 = vpack.c.b16 %v439, %v437
    %v470 = vpack.c.b16 %v442, %v440
    %v471 = vpack.c.b16 %v443, %v441
    %v472 = vpack.c.b16 %v446, %v444
    %v473 = vpack.c.b16 %v447, %v445
    %v474 = vpack.c.b16 %v450, %v448
    %v475 = vpack.c.b16 %v451, %v449
    %v476 = vpack.c.b16 %v454, %v452
    %v477 = vpack.c.b16 %v455, %v453
    %v478 = vpack.c.b16 %v458, %v456
    %v479 = vpack.c.b16 %v459, %v457
    %v480 = vpack.c.b16 %v462, %v460
    %v481 = vpack.c.b16 %v463, %v461
    %v482 = vpack.c.b16 %v466, %v464
    %v483 = vpack.c.b16 %v467, %v465
    %500 = vmatpush.bf16.msra.mxu0 %v482
    %501 = vmatpush.bf16.msra.mxu0 %v480
    %502 = vmatpush.bf16.msra.mxu0 %v478
    %503 = vmatpush.bf16.msra.mxu0 %v476
    %504 = vmatpush.bf16.msra.mxu0 %v474
    %505 = vmatpush.bf16.msra.mxu0 %v472
    %506 = vmatpush.bf16.msra.mxu0 %v470
    %507 = vmatpush.bf16.msra.mxu0 %v468
    %508 = vmatmul.bf16.gmra.mxu0 %v419
    %v509 = vpop.f32.mrf.mxu0
    %v510 = vadd.f32 0.0, %v509
    %v511 = vpop.f32.mrf.mxu0
    %512 = vdwg.mxu0
    %513 = vmatpush.bf16.msra.mxu0 %v483
    %514 = vmatpush.bf16.msra.mxu0 %v481
    %515 = vmatpush.bf16.msra.mxu0 %v479
    %516 = vmatpush.bf16.msra.mxu0 %v477
    %517 = vmatpush.bf16.msra.mxu0 %v475
    %518 = vmatpush.bf16.msra.mxu0 %v473
    %519 = vmatpush.bf16.msra.mxu0 %v471
    %520 = vmatpush.bf16.msra.mxu0 %v469
    %521 = vmatmul.bf16.gmra.mxu0 %v419
    %v522 = vpop.f32.mrf.mxu0
    %v523 = vadd.f32 0.0, %v522
    %v524 = vpop.f32.mrf.mxu0
    %525 = vdwg.mxu0
    %v542 = vunpack.c.l.b16 %v370
    %v543 = vunpack.c.h.b16 %v370
    %v544 = vunpack.c.l.b16 %v371
    %v545 = vunpack.c.h.b16 %v371
    %v546 = vunpack.c.l.b16 %v372
    %v547 = vunpack.c.h.b16 %v372
    %v548 = vunpack.c.l.b16 %v373
    %v549 = vunpack.c.h.b16 %v373
    %v550 = vunpack.c.l.b16 %v374
    %v551 = vunpack.c.h.b16 %v374
    %v552 = vunpack.c.l.b16 %v375
    %v553 = vunpack.c.h.b16 %v375
    %v554 = vunpack.c.l.b16 %v376
    %v555 = vunpack.c.h.b16 %v376
    %v556 = vunpack.c.l.b16 %v377
    %v557 = vunpack.c.h.b16 %v377
    %v558 = vunpack.c.l.b16 %v378
    %v559 = vunpack.c.h.b16 %v378
    %v560 = vunpack.c.l.b16 %v379
    %v561 = vunpack.c.h.b16 %v379
    %v562 = vunpack.c.l.b16 %v380
    %v563 = vunpack.c.h.b16 %v380
    %v564 = vunpack.c.l.b16 %v381
    %v565 = vunpack.c.h.b16 %v381
    %v566 = vunpack.c.l.b16 %v382
    %v567 = vunpack.c.h.b16 %v382
    %v568 = vunpack.c.l.b16 %v383
    %v569 = vunpack.c.h.b16 %v383
    %v570 = vunpack.c.l.b16 %v384
    %v571 = vunpack.c.h.b16 %v384
    %v572 = vunpack.c.l.b16 %v385
    %v573 = vunpack.c.h.b16 %v385
    %v574 = vpack.c.b16 %v544, %v542
    %v575 = vpack.c.b16 %v545, %v543
    %v576 = vpack.c.b16 %v548, %v546
    %v577 = vpack.c.b16 %v549, %v547
    %v578 = vpack.c.b16 %v552, %v550
    %v579 = vpack.c.b16 %v553, %v551
    %v580 = vpack.c.b16 %v556, %v554
    %v581 = vpack.c.b16 %v557, %v555
    %v582 = vpack.c.b16 %v560, %v558
    %v583 = vpack.c.b16 %v561, %v559
    %v584 = vpack.c.b16 %v564, %v562
    %v585 = vpack.c.b16 %v565, %v563
    %v586 = vpack.c.b16 %v568, %v566
    %v587 = vpack.c.b16 %v569, %v567
    %v588 = vpack.c.b16 %v572, %v570
    %v589 = vpack.c.b16 %v573, %v571
    %606 = vmatpush.bf16.msra.mxu0 %v588
    %607 = vmatpush.bf16.msra.mxu0 %v586
    %608 = vmatpush.bf16.msra.mxu0 %v584
    %609 = vmatpush.bf16.msra.mxu0 %v582
    %610 = vmatpush.bf16.msra.mxu0 %v580
    %611 = vmatpush.bf16.msra.mxu0 %v578
    %612 = vmatpush.bf16.msra.mxu0 %v576
    %613 = vmatpush.bf16.msra.mxu0 %v574
    %614 = vmatmul.bf16.gmra.mxu0 %v405
    %v615 = vpop.f32.mrf.mxu0
    %v616 = vadd.f32 %v510, %v615
    %v617 = vpop.f32.mrf.mxu0
    %618 = vdwg.mxu0
    %619 = vmatpush.bf16.msra.mxu0 %v589
    %620 = vmatpush.bf16.msra.mxu0 %v587
    %621 = vmatpush.bf16.msra.mxu0 %v585
    %622 = vmatpush.bf16.msra.mxu0 %v583
    %623 = vmatpush.bf16.msra.mxu0 %v581
    %624 = vmatpush.bf16.msra.mxu0 %v579
    %625 = vmatpush.bf16.msra.mxu0 %v577
    %626 = vmatpush.bf16.msra.mxu0 %v575
    %627 = vmatmul.bf16.gmra.mxu0 %v405
    %v628 = vpop.f32.mrf.mxu0
    %v629 = vadd.f32 %v523, %v628
    %v630 = vpop.f32.mrf.mxu0
    %631 = vdwg.mxu0
    %v633 = vperm.slane %v404, 0
    %v634 = vperm.slane %v404, 1
    %v637 = vadd.f32 %v616, %v633
    %v638 = vadd.f32 %v629, %v634
    %v639 = vmax.f32 %v638, 0.0
    %v640 = vadd.f32 %v637, %v639
    %s641 = scalar_lea.vmem [#allocation2], 512
    %v642 = vld [vmem:[%s641] sm:$0xff]
    %v643 = vld [vmem:[%s641 + $0x8] sm:$0xff]
    %v644 = vld [vmem:[%s641 + $0x10] sm:$0xff]
    %v645 = vld [vmem:[%s641 + $0x18] sm:$0xff]
    %v646 = vld [vmem:[%s641 + $0x20] sm:$0xff]
    %v647 = vld [vmem:[%s641 + $0x28] sm:$0xff]
    %v648 = vld [vmem:[%s641 + $0x30] sm:$0xff]
    %v649 = vld [vmem:[%s641 + $0x38] sm:$0xff]
    %v650 = vld [vmem:[%s641 + $0x40] sm:$0xff]
    %v651 = vld [vmem:[%s641 + $0x48] sm:$0xff]
    %v652 = vld [vmem:[%s641 + $0x50] sm:$0xff]
    %v653 = vld [vmem:[%s641 + $0x58] sm:$0xff]
    %v654 = vld [vmem:[%s641 + $0x60] sm:$0xff]
    %v655 = vld [vmem:[%s641 + $0x68] sm:$0xff]
    %v656 = vld [vmem:[%s641 + $0x70] sm:$0xff]
    %v657 = vld [vmem:[%s641 + $0x78] sm:$0xff]
    %s658 = scalar_lea.vmem [#allocation2], 640
    %v659 = vld [vmem:[%s658] sm:$0xff]
    %v660 = vld [vmem:[%s658 + $0x8] sm:$0xff]
    %v661 = vld [vmem:[%s658 + $0x10] sm:$0xff]
    %v662 = vld [vmem:[%s658 + $0x18] sm:$0xff]
    %v663 = vld [vmem:[%s658 + $0x20] sm:$0xff]
    %v664 = vld [vmem:[%s658 + $0x28] sm:$0xff]
    %v665 = vld [vmem:[%s658 + $0x30] sm:$0xff]
    %v666 = vld [vmem:[%s658 + $0x38] sm:$0xff]
    %v667 = vld [vmem:[%s658 + $0x40] sm:$0xff]
    %v668 = vld [vmem:[%s658 + $0x48] sm:$0xff]
    %v669 = vld [vmem:[%s658 + $0x50] sm:$0xff]
    %v670 = vld [vmem:[%s658 + $0x58] sm:$0xff]
    %v671 = vld [vmem:[%s658 + $0x60] sm:$0xff]
    %v672 = vld [vmem:[%s658 + $0x68] sm:$0xff]
    %v673 = vld [vmem:[%s658 + $0x70] sm:$0xff]
    %v674 = vld [vmem:[%s658 + $0x78] sm:$0xff]
    %s675 = scalar_lea.vmem %s1, 4
    %v676 = vld [vmem:[%s675] sm:$0x3]
    %v677 = vpack.c.bf16 %v640, %v640
    %678 = vmatpush.bf16.msra.mxu0 %v125
    %679 = vmatpush.bf16.msra.mxu0 %v124
    %680 = vmatpush.bf16.msra.mxu0 %v123
    %681 = vmatpush.bf16.msra.mxu0 %v122
    %682 = vmatpush.bf16.msra.mxu0 %v121
    %683 = vmatpush.bf16.msra.mxu0 %v120
    %684 = vmatpush.bf16.msra.mxu0 %v119
    %685 = vmatpush.bf16.msra.mxu0 %v118
    %686 = vmatmul.bf16.gmra.mxu0 %v677
    %v687 = vpop.f32.mrf.mxu0
    %v688 = vadd.f32 0.0, %v687
    %v689 = vpop.f32.mrf.mxu0
    %690 = vdwg.mxu0
    %v691 = vpack.c.bf16 %v688, %v688
    %v708 = vunpack.c.l.b16 %v659
    %v709 = vunpack.c.h.b16 %v659
    %v710 = vunpack.c.l.b16 %v660
    %v711 = vunpack.c.h.b16 %v660
    %v712 = vunpack.c.l.b16 %v661
    %v713 = vunpack.c.h.b16 %v661
    %v714 = vunpack.c.l.b16 %v662
    %v715 = vunpack.c.h.b16 %v662
    %v716 = vunpack.c.l.b16 %v663
    %v717 = vunpack.c.h.b16 %v663
    %v718 = vunpack.c.l.b16 %v664
    %v719 = vunpack.c.h.b16 %v664
    %v720 = vunpack.c.l.b16 %v665
    %v721 = vunpack.c.h.b16 %v665
    %v722 = vunpack.c.l.b16 %v666
    %v723 = vunpack.c.h.b16 %v666
    %v724 = vunpack.c.l.b16 %v667
    %v725 = vunpack.c.h.b16 %v667
    %v726 = vunpack.c.l.b16 %v668
    %v727 = vunpack.c.h.b16 %v668
    %v728 = vunpack.c.l.b16 %v669
    %v729 = vunpack.c.h.b16 %v669
    %v730 = vunpack.c.l.b16 %v670
    %v731 = vunpack.c.h.b16 %v670
    %v732 = vunpack.c.l.b16 %v671
    %v733 = vunpack.c.h.b16 %v671
    %v734 = vunpack.c.l.b16 %v672
    %v735 = vunpack.c.h.b16 %v672
    %v736 = vunpack.c.l.b16 %v673
    %v737 = vunpack.c.h.b16 %v673
    %v738 = vunpack.c.l.b16 %v674
    %v739 = vunpack.c.h.b16 %v674
    %v740 = vpack.c.b16 %v710, %v708
    %v741 = vpack.c.b16 %v711, %v709
    %v742 = vpack.c.b16 %v714, %v712
    %v743 = vpack.c.b16 %v715, %v713
    %v744 = vpack.c.b16 %v718, %v716
    %v745 = vpack.c.b16 %v719, %v717
    %v746 = vpack.c.b16 %v722, %v720
    %v747 = vpack.c.b16 %v723, %v721
    %v748 = vpack.c.b16 %v726, %v724
    %v749 = vpack.c.b16 %v727, %v725
    %v750 = vpack.c.b16 %v730, %v728
    %v751 = vpack.c.b16 %v731, %v729
    %v752 = vpack.c.b16 %v734, %v732
    %v753 = vpack.c.b16 %v735, %v733
    %v754 = vpack.c.b16 %v738, %v736
    %v755 = vpack.c.b16 %v739, %v737
    %772 = vmatpush.bf16.msra.mxu0 %v754
    %773 = vmatpush.bf16.msra.mxu0 %v752
    %774 = vmatpush.bf16.msra.mxu0 %v750
    %775 = vmatpush.bf16.msra.mxu0 %v748
    %776 = vmatpush.bf16.msra.mxu0 %v746
    %777 = vmatpush.bf16.msra.mxu0 %v744
    %778 = vmatpush.bf16.msra.mxu0 %v742
    %779 = vmatpush.bf16.msra.mxu0 %v740
    %780 = vmatmul.bf16.gmra.mxu0 %v691
    %v781 = vpop.f32.mrf.mxu0
    %v782 = vadd.f32 0.0, %v781
    %v783 = vpop.f32.mrf.mxu0
    %784 = vdwg.mxu0
    %785 = vmatpush.bf16.msra.mxu0 %v755
    %786 = vmatpush.bf16.msra.mxu0 %v753
    %787 = vmatpush.bf16.msra.mxu0 %v751
    %788 = vmatpush.bf16.msra.mxu0 %v749
    %789 = vmatpush.bf16.msra.mxu0 %v747
    %790 = vmatpush.bf16.msra.mxu0 %v745
    %791 = vmatpush.bf16.msra.mxu0 %v743
    %792 = vmatpush.bf16.msra.mxu0 %v741
    %793 = vmatmul.bf16.gmra.mxu0 %v691
    %v794 = vpop.f32.mrf.mxu0
    %v795 = vadd.f32 0.0, %v794
    %v796 = vpop.f32.mrf.mxu0
    %797 = vdwg.mxu0
    %v814 = vunpack.c.l.b16 %v642
    %v815 = vunpack.c.h.b16 %v642
    %v816 = vunpack.c.l.b16 %v643
    %v817 = vunpack.c.h.b16 %v643
    %v818 = vunpack.c.l.b16 %v644
    %v819 = vunpack.c.h.b16 %v644
    %v820 = vunpack.c.l.b16 %v645
    %v821 = vunpack.c.h.b16 %v645
    %v822 = vunpack.c.l.b16 %v646
    %v823 = vunpack.c.h.b16 %v646
    %v824 = vunpack.c.l.b16 %v647
    %v825 = vunpack.c.h.b16 %v647
    %v826 = vunpack.c.l.b16 %v648
    %v827 = vunpack.c.h.b16 %v648
    %v828 = vunpack.c.l.b16 %v649
    %v829 = vunpack.c.h.b16 %v649
    %v830 = vunpack.c.l.b16 %v650
    %v831 = vunpack.c.h.b16 %v650
    %v832 = vunpack.c.l.b16 %v651
    %v833 = vunpack.c.h.b16 %v651
    %v834 = vunpack.c.l.b16 %v652
    %v835 = vunpack.c.h.b16 %v652
    %v836 = vunpack.c.l.b16 %v653
    %v837 = vunpack.c.h.b16 %v653
    %v838 = vunpack.c.l.b16 %v654
    %v839 = vunpack.c.h.b16 %v654
    %v840 = vunpack.c.l.b16 %v655
    %v841 = vunpack.c.h.b16 %v655
    %v842 = vunpack.c.l.b16 %v656
    %v843 = vunpack.c.h.b16 %v656
    %v844 = vunpack.c.l.b16 %v657
    %v845 = vunpack.c.h.b16 %v657
    %v846 = vpack.c.b16 %v816, %v814
    %v847 = vpack.c.b16 %v817, %v815
    %v848 = vpack.c.b16 %v820, %v818
    %v849 = vpack.c.b16 %v821, %v819
    %v850 = vpack.c.b16 %v824, %v822
    %v851 = vpack.c.b16 %v825, %v823
    %v852 = vpack.c.b16 %v828, %v826
    %v853 = vpack.c.b16 %v829, %v827
    %v854 = vpack.c.b16 %v832, %v830
    %v855 = vpack.c.b16 %v833, %v831
    %v856 = vpack.c.b16 %v836, %v834
    %v857 = vpack.c.b16 %v837, %v835
    %v858 = vpack.c.b16 %v840, %v838
    %v859 = vpack.c.b16 %v841, %v839
    %v860 = vpack.c.b16 %v844, %v842
    %v861 = vpack.c.b16 %v845, %v843
    %878 = vmatpush.bf16.msra.mxu0 %v860
    %879 = vmatpush.bf16.msra.mxu0 %v858
    %880 = vmatpush.bf16.msra.mxu0 %v856
    %881 = vmatpush.bf16.msra.mxu0 %v854
    %882 = vmatpush.bf16.msra.mxu0 %v852
    %883 = vmatpush.bf16.msra.mxu0 %v850
    %884 = vmatpush.bf16.msra.mxu0 %v848
    %885 = vmatpush.bf16.msra.mxu0 %v846
    %886 = vmatmul.bf16.gmra.mxu0 %v677
    %v887 = vpop.f32.mrf.mxu0
    %v888 = vadd.f32 %v782, %v887
    %v889 = vpop.f32.mrf.mxu0
    %890 = vdwg.mxu0
    %891 = vmatpush.bf16.msra.mxu0 %v861
    %892 = vmatpush.bf16.msra.mxu0 %v859
    %893 = vmatpush.bf16.msra.mxu0 %v857
    %894 = vmatpush.bf16.msra.mxu0 %v855
    %895 = vmatpush.bf16.msra.mxu0 %v853
    %896 = vmatpush.bf16.msra.mxu0 %v851
    %897 = vmatpush.bf16.msra.mxu0 %v849
    %898 = vmatpush.bf16.msra.mxu0 %v847
    %899 = vmatmul.bf16.gmra.mxu0 %v677
    %v900 = vpop.f32.mrf.mxu0
    %v901 = vadd.f32 %v795, %v900
    %v902 = vpop.f32.mrf.mxu0
    %903 = vdwg.mxu0
    %v905 = vperm.slane %v676, 0
    %v906 = vperm.slane %v676, 1
    %v909 = vadd.f32 %v888, %v905
    %v910 = vadd.f32 %v901, %v906
    %v911 = vmax.f32 %v910, 0.0
    %v912 = vadd.f32 %v909, %v911
    %v913 = vld [vmem:[%s3] sm:$0x1]
    %v914 = vmul.f32 %v912, %v913
    %vm915 = vcmask 1040384
    %v916 = vsel %vm915, %v914, 0.0
    %917 = vadd.xlane.f32.xlu0 %v916
    %v918 = vpop.xlane.xlu0 %917
    %vm919 = vcmask 0
    %920 = vst.msk [vmem:[#allocation4] sm:$0x1] %vm919, %v918
    // Predicated region
    $region18: #{operator_net_pallas.1} parent=1 // pred_check
      _
    $region19: #{operator_net_pallas.1} parent=1 // pred_check_branch
      %922 = sbr.rel (0) target = $region21
    $region20: #{operator_net_pallas.1} parent=1 // pred_region
      %924 = vsyncadd [#allocation5], 0
      %s926 = sshll.u32 [#allocation4], 4
      %s927 = int_to_ptr.vmem [resolvable:$true] %s926
      %s928 = sshll.u32 %s4, 4
      %s929 = int_to_ptr.hbm [resolvable:$true] %s928
      %931 = dma.vmem_to_hbm [thread:$0]  %s927, 16, %s929, [#allocation5]
    $region21: #{operator_net_pallas.1} parent=1 // pred_fallthru
      _
    // Predicated region
    $region22: #{operator_net_pallas.1} parent=1 // pred_check
      _
    $region23: #{operator_net_pallas.1} parent=1 // pred_check_branch
      %933 = sbr.rel (0) target = $region25
    $region24: #{operator_net_pallas.1} parent=1 // pred_region
      %935 = dma.done [#allocation5], 16
    $region25: #{operator_net_pallas.1} parent=1 // pred_fallthru
      _
    %936 = vsyncpa [#allocation5], 1
  %937 = vsyncmov [#allocation3]
  %s938 = vpop.sfrf %937
  %p939 = scmp.eq.s32.totalorder %s938, 0
  %p940 = pneg %p939
  %942 = shalt.err (%p940)

</llo_original>
